<compile_context>
chip_gen: v5e
topology: v5e:2x2
jax: 0.10.0
libtpu: 0.0.40
codegen_flags: <defaults>
</compile_context>

<pallas_src>
import jax
import jax.numpy as jnp
from jax.experimental import pallas as pl
from jax.experimental.pallas import tpu as pltpu

# Model hyperparameters (consistent with the module's forward)
STATE_SIZE = 8
ACTION_SIZE = 4
HIDDEN = 256
BATCH = 2

OUT_W = 8                    # compact combined output width (>= ACTION_SIZE + 1, mult of 8 not needed: == full dim)
MAX_BATCH_TILE = 2048        # rows per grid step (sweepable; ~4 MiB double-buffered VMEM)
SMALL_BATCH_THRESHOLD = 256  # below this, a plain XLA dot beats pad+pallas_call+slice


def _round_up(x, m):
    return (x + m - 1) // m * m


def _cdiv(a, b):
    return -(-a // b)


# --------------------------------------------------------------------------
# Kernel: one skinny MXU matmul + bias add per batch tile.
# --------------------------------------------------------------------------
def actor_critic_kernel(s_ref, w_ref, b_ref, out_ref):
    # s_ref:   [TB, STATE_SIZE]  input states tile
    # w_ref:   [STATE_SIZE, OUT_W]  collapsed+fused actor/critic weights
    # b_ref:   [1, OUT_W]           collapsed+fused bias
    # out_ref: [TB, OUT_W]          logits in lanes 0:ACTION_SIZE, value in lane ACTION_SIZE
    y = jnp.dot(s_ref[...], w_ref[...], preferred_element_type=jnp.float32)
    out_ref[...] = (y + b_ref[...]).astype(out_ref.dtype)


# --------------------------------------------------------------------------
# One-time parameter packing (hoisted out of the per-call hot path).
# --------------------------------------------------------------------------
def pack_params(params):
    """Collapse each head's two Linears into one affine map and fuse the heads.

    Returns (w_comb [STATE_SIZE, OUT_W], b_comb [1, OUT_W]); call once per
    parameter update, not per forward.
    """
    (wa1, ba1, wa2, ba2, wc1, bc1, wc2, bc2) = params
    w_eff = jnp.concatenate([wa1 @ wa2, wc1 @ wc2], axis=1)                 # [8, 5]
    b_eff = jnp.concatenate([ba1 @ wa2 + ba2, bc1 @ wc2 + bc2], axis=1)     # [1, 5]
    pad = OUT_W - (ACTION_SIZE + 1)
    w_comb = jnp.pad(w_eff.astype(jnp.float32), ((0, 0), (0, pad)))
    b_comb = jnp.pad(b_eff.astype(jnp.float32), ((0, 0), (0, pad)))
    return w_comb, b_comb


# --------------------------------------------------------------------------
# Forward paths
# --------------------------------------------------------------------------
def actor_critic_forward_pallas(s, w_comb, b_comb):
    B = s.shape[0]
    b8 = _round_up(B, 8)                          # f32 sublane minimum
    grid = _cdiv(b8, MAX_BATCH_TILE)              # >= 2 steps for large batches (feeds both TCs on v7x)
    tile_b = _round_up(_cdiv(b8, grid), 8)        # even split -> < 8 padded rows per step
    b_pad = grid * tile_b
    s_pad = jnp.pad(s.astype(jnp.float32), ((0, b_pad - B), (0, 0)))

    out = pl.pallas_call(
        actor_critic_kernel,
        out_shape=jax.ShapeDtypeStruct((b_pad, OUT_W), jnp.float32),
        grid=(grid,),
        in_specs=[
            pl.BlockSpec((tile_b, STATE_SIZE), lambda i: (i, 0)),
            pl.BlockSpec((STATE_SIZE, OUT_W), lambda i: (0, 0)),
            pl.BlockSpec((1, OUT_W), lambda i: (0, 0)),
        ],
        out_specs=pl.BlockSpec((tile_b, OUT_W), lambda i: (i, 0)),
        compiler_params=pltpu.CompilerParams(
            dimension_semantics=("parallel",),    # batch rows shard across TCs on v7x
        ),
    )(s_pad, w_comb, b_comb)

    # Compact output: slicing 8 lanes back is cheap (no 128-wide slab re-read).
    act_logits = out[:B, :ACTION_SIZE]
    val = out[:B, ACTION_SIZE:ACTION_SIZE + 1]
    return act_logits, val


def actor_critic_forward_xla(s, w_comb, b_comb):
    """Tiny-batch (act()) fast path: one fused XLA dot, no padding / kernel launch."""
    y = s.astype(jnp.float32) @ w_comb + b_comb
    return y[:, :ACTION_SIZE], y[:, ACTION_SIZE:ACTION_SIZE + 1]


def actor_critic_forward(s, w_comb, b_comb, force_pallas=False):
    if force_pallas or s.shape[0] >= SMALL_BATCH_THRESHOLD:
        return actor_critic_forward_pallas(s, w_comb, b_comb)
    return actor_critic_forward_xla(s, w_comb, b_comb)


# --------------------------------------------------------------------------
# Synthetic params + literal reference
# --------------------------------------------------------------------------
def init_params(key):
    """Deterministic synthetic init (shapes match the nn.Linear layers, stored [in, out])."""
    ks = jax.random.split(key, 8)

    def linear(kw, kb, fan_in, fan_out):
        bound = 1.0 / jnp.sqrt(fan_in)
        w = jax.random.uniform(kw, (fan_in, fan_out), jnp.float32, -bound, bound)
        b = jax.random.uniform(kb, (1, fan_out), jnp.float32, -bound, bound)
        return w, b

    wa1, ba1 = linear(ks[0], ks[1], STATE_SIZE, HIDDEN)
    wa2, ba2 = linear(ks[2], ks[3], HIDDEN, ACTION_SIZE)
    wc1, bc1 = linear(ks[4], ks[5], STATE_SIZE, HIDDEN)
    wc2, bc2 = linear(ks[6], ks[7], HIDDEN, 1)
    return (wa1, ba1, wa2, ba2, wc1, bc1, wc2, bc2)


def reference_forward(s, params):
    """Literal two-layer-per-head forward of the original module."""
    (wa1, ba1, wa2, ba2, wc1, bc1, wc2, bc2) = params
    act = (s @ wa1 + ba1) @ wa2 + ba2
    val = (s @ wc1 + bc1) @ wc2 + bc2
    return act, val


if __name__ == "__main__":
    key = jax.random.PRNGKey(0)
    k_params, k_small, k_large = jax.random.split(key, 3)

    params = init_params(k_params)
    w_comb, b_comb = pack_params(params)   # hoisted: once per parameter update

    # --- small (act()-style) batch, Pallas path forced so the kernel runs
    s_small = jax.random.normal(k_small, (BATCH, STATE_SIZE), dtype=jnp.float32)
    act_logits, val = actor_critic_forward(s_small, w_comb, b_comb, force_pallas=True)
    jax.block_until_ready((act_logits, val))

    act_ref, val_ref = reference_forward(s_small, params)
    assert act_logits.shape == (BATCH, ACTION_SIZE)
    assert val.shape == (BATCH, 1)
    assert jnp.allclose(act_logits, act_ref, atol=1e-4, rtol=1e-4)
    assert jnp.allclose(val, val_ref, atol=1e-4, rtol=1e-4)

    # --- same small batch through the default dispatch (XLA fast path)
    a2, v2 = actor_critic_forward(s_small, w_comb, b_comb)
    assert jnp.allclose(a2, act_ref, atol=1e-4, rtol=1e-4)
    assert jnp.allclose(v2, val_ref, atol=1e-4, rtol=1e-4)

    # --- larger ragged rollout batch: exercises pad-to-8 + multi-step grid
    B_BIG = 2600
    s_big = jax.random.normal(k_large, (B_BIG, STATE_SIZE), dtype=jnp.float32)
    a3, v3 = actor_critic_forward(s_big, w_comb, b_comb)
    jax.block_until_ready((a3, v3))
    a3_ref, v3_ref = reference_forward(s_big, params)
    assert a3.shape == (B_BIG, ACTION_SIZE) and v3.shape == (B_BIG, 1)
    assert jnp.allclose(a3, a3_ref, atol=1e-4, rtol=1e-4)
    assert jnp.allclose(v3, v3_ref, atol=1e-4, rtol=1e-4)

    # TODO(synk): `act()`'s Categorical sampling (dist.sample()) is host/JAX-side
    # (e.g. jax.random.categorical on the logits), not part of the forward pass,
    # so it is intentionally not in the kernel.
    print("KERNEL_OK")
</pallas_src>

<mosaic_0001>
module attributes {stable_mosaic.version = 11 : i64} {
  func.func @actor_critic_kernel(%arg0: i32, %arg1: memref<8x8xf32, #tpu.memory_space<vmem>>, %arg2: memref<8x8xf32, #tpu.memory_space<vmem>>, %arg3: memref<1x8xf32, #tpu.memory_space<vmem>>, %arg4: memref<8x8xf32, #tpu.memory_space<vmem>>) attributes {dimension_semantics = [#tpu.dimension_semantics<parallel>], iteration_bounds = array<i64: 1>, scalar_prefetch = 0 : i64, scratch_operands = 0 : i64, tpu.core_type = #tpu.core_type<tc>, window_params = [{transform_indices = @transform_0, window_bounds = array<i64: 8, 8>}, {pipeline_mode = #tpu.pipeline_mode<synchronous>, transform_indices = @transform_1, window_bounds = array<i64: 8, 8>}, {pipeline_mode = #tpu.pipeline_mode<synchronous>, transform_indices = @transform_2, window_bounds = array<i64: 1, 8>}, {transform_indices = @transform_3, window_bounds = array<i64: 8, 8>}]} {
    %c0 = arith.constant 0 : index
    %c0_0 = arith.constant 0 : index
    %0 = vector.load %arg1[%c0, %c0_0] : memref<8x8xf32, #tpu.memory_space<vmem>>, vector<8x8xf32>
    %c0_1 = arith.constant 0 : index
    %c0_2 = arith.constant 0 : index
    %1 = vector.load %arg2[%c0_1, %c0_2] : memref<8x8xf32, #tpu.memory_space<vmem>>, vector<8x8xf32>
    %cst = arith.constant dense<0.000000e+00> : vector<8x8xf32>
    %2 = tpu.matmul %0, %1, %cst {dimension_numbers = #tpu.dot_dimension_numbers<[1], [0], [0], [1], [0, 0, 1, 1], [], []>} : vector<8x8xf32>, vector<8x8xf32>, vector<8x8xf32> -> vector<8x8xf32>
    %c0_3 = arith.constant 0 : index
    %c0_4 = arith.constant 0 : index
    %3 = vector.load %arg3[%c0_3, %c0_4] : memref<1x8xf32, #tpu.memory_space<vmem>>, vector<1x8xf32>
    %4 = vector.broadcast %3 : vector<1x8xf32> to vector<8x8xf32>
    %5 = arith.addf %2, %4 : vector<8x8xf32>
    %c0_5 = arith.constant 0 : index
    %c0_6 = arith.constant 0 : index
    %6 = vector.load %arg4[%c0_5, %c0_6] : memref<8x8xf32, #tpu.memory_space<vmem>>, vector<8x8xf32>
    tpu.vector_store %arg4[%c0_5, %c0_6], %5 {strides = array<i32>} : memref<8x8xf32, #tpu.memory_space<vmem>>, vector<8x8xf32>,
    return
  }
  func.func @transform_0(%arg0: i32) -> (i32, i32) {
    %c0_i32 = arith.constant 0 : i32
    %c0_i32_0 = arith.constant 0 : i32
    return %arg0, %c0_i32 : i32, i32
  }
  func.func @transform_1(%arg0: i32) -> (i32, i32) {
    %c0_i32 = arith.constant 0 : i32
    %c0_i32_0 = arith.constant 0 : i32
    %c0_i32_1 = arith.constant 0 : i32
    return %c0_i32, %c0_i32_0 : i32, i32
  }
  func.func @transform_2(%arg0: i32) -> (i32, i32) {
    %c0_i32 = arith.constant 0 : i32
    %c0_i32_0 = arith.constant 0 : i32
    %c0_i32_1 = arith.constant 0 : i32
    return %c0_i32, %c0_i32_0 : i32, i32
  }
  func.func @transform_3(%arg0: i32) -> (i32, i32) {
    %c0_i32 = arith.constant 0 : i32
    %c0_i32_0 = arith.constant 0 : i32
    return %arg0, %c0_i32 : i32, i32
  }
}

</mosaic_0001>

<llo_original>
// kernel: tpu_custom_call.1
$region0: #{tpu_custom_call.1}
  #allocation0 [shape = 'u32[]', space=smem, size = 0x4, offset = 0x4, fixed_abs, tag = 'smem constant byte address 0x4 - core index']
  #allocation1 [shape = 'u32[72,128]{1,0:T(1,128)}', space=vmem, size = 0x9000, scoped, tag = 'internal scratch']
  %s0 = inlined_call_operand.hbm [shape: f32[8,8], index: 0, kind: input, shape index: {}]
  %s1 = inlined_call_operand.hbm [shape: f32[8,8], index: 1, kind: input, shape index: {}]
  %s2 = inlined_call_operand.vmem [shape: f32[1,8], index: 2, kind: input, shape index: {}]
  %s3 = inlined_call_operand.hbm [shape: f32[8,8], index: 3, kind: output, shape index: {}]
  %s4 = sld [smem:[#allocation0]]
  $region30: #{tpu_custom_call.1} parent=0
    _
  %s6 = ssub.s32 1, %s4
  %s7 = scalar_select 0, %s6, %s4
  $region1: #{tpu_custom_call.1} parent=0
    #allocation2 [shape = 'u8[4096]{0}', space=vmem, size = 0x1000, scoped, tag = 'input window, operand 0, single buffered']
    #allocation3 [shape = 's32[1]{0}', space=sflag, size = 0x4, scoped, tag = 'scoped memory for tpu_custom_call.1']
    #allocation4 [shape = 's32[1]{0}', space=sflag, size = 0x4, scoped, tag = 'scoped memory for tpu_custom_call.1']
    #allocation5 [shape = 'u8[4096]{0}', space=vmem, size = 0x1000, scoped, tag = 'input window, operand 1, single buffered']
    #allocation6 [shape = 's32[1]{0}', space=sflag, size = 0x4, scoped, tag = 'scoped memory for tpu_custom_call.1']
    #allocation7 [shape = 'u8[4096]{0}', space=vmem, size = 0x1000, scoped, tag = 'output window, operand 0, single buffered']
    %8 = vsyncpa [#allocation3], 0
    %9 = vsyncpa [#allocation6], 0
    %10 = vsyncpa [#allocation4], 0
    // Predicated region
    $region2: #{tpu_custom_call.1} parent=1 // pred_check
      _
    $region3: #{tpu_custom_call.1} parent=1 // pred_check_branch
      %12 = sbr.rel (0) target = $region5
    $region4: #{tpu_custom_call.1} parent=1 // pred_region
      %14 = vsyncadd [#allocation3], 0
      %s16 = sshll.u32 %s0, 4
      %s17 = int_to_ptr.hbm [resolvable:$true] %s16
      %s18 = sshll.u32 [#allocation2], 4
      %s19 = int_to_ptr.vmem [resolvable:$true] %s18
      %21 = dma.hbm_to_vmem [thread:$0]  %s17, 128, %s19, [#allocation3]
    $region5: #{tpu_custom_call.1} parent=1 // pred_fallthru
      _
    // Predicated region
    $region6: #{tpu_custom_call.1} parent=1 // pred_check
      _
    $region7: #{tpu_custom_call.1} parent=1 // pred_check_branch
      %23 = sbr.rel (0) target = $region9
    $region8: #{tpu_custom_call.1} parent=1 // pred_region
      %25 = vsyncadd [#allocation6], 0
      %s27 = sshll.u32 %s1, 4
      %s28 = int_to_ptr.hbm [resolvable:$true] %s27
      %s29 = sshll.u32 [#allocation5], 4
      %s30 = int_to_ptr.vmem [resolvable:$true] %s29
      %32 = dma.hbm_to_vmem [thread:$0]  %s28, 128, %s30, [#allocation6]
    $region9: #{tpu_custom_call.1} parent=1 // pred_fallthru
      _
    // Predicated region
    $region10: #{tpu_custom_call.1} parent=1 // pred_check
      _
    $region11: #{tpu_custom_call.1} parent=1 // pred_check_branch
      %34 = sbr.rel (0) target = $region13
    $region12: #{tpu_custom_call.1} parent=1 // pred_region
      _
    $region13: #{tpu_custom_call.1} parent=1 // pred_fallthru
      _
    // Predicated region
    $region14: #{tpu_custom_call.1} parent=1 // pred_check
      _
    $region15: #{tpu_custom_call.1} parent=1 // pred_check_branch
      %36 = sbr.rel (0) target = $region17
    $region16: #{tpu_custom_call.1} parent=1 // pred_region
      %38 = dma.done [#allocation3], 128
    $region17: #{tpu_custom_call.1} parent=1 // pred_fallthru
      _
    // Predicated region
    $region18: #{tpu_custom_call.1} parent=1 // pred_check
      _
    $region19: #{tpu_custom_call.1} parent=1 // pred_check_branch
      %40 = sbr.rel (0) target = $region21
    $region20: #{tpu_custom_call.1} parent=1 // pred_region
      %42 = dma.done [#allocation6], 128
    $region21: #{tpu_custom_call.1} parent=1 // pred_fallthru
      _
    %v43 = vld [vmem:[#allocation2] sm:$0xff]
    %v44 = vld [vmem:[#allocation5] sm:$0xff]
    %v45 = vld [vmem:[%s2] sm:$0x1]
    %v47 = vperm.slane %v45, 0
    %vm49 = vcmask 64512
    %v51 = vsel %vm49, %v43, 0
    %53 = vmatpush.msra.mxu0 0.0
    %54 = vmatpush.msra.mxu0 0.0
    %55 = vmatpush.msra.mxu0 0.0
    %56 = vmatpush.msra.mxu0 0.0
    %57 = vmatpush.msra.mxu0 0.0
    %58 = vmatpush.msra.mxu0 0.0
    %59 = vmatpush.msra.mxu0 0.0
    %60 = vmatpush.msra.mxu0 0.0
    %61 = vmatpush.msra.mxu0 0.0
    %62 = vmatpush.msra.mxu0 0.0
    %63 = vmatpush.msra.mxu0 0.0
    %64 = vmatpush.msra.mxu0 0.0
    %65 = vmatpush.msra.mxu0 0.0
    %66 = vmatpush.msra.mxu0 0.0
    %67 = vmatpush.msra.mxu0 0.0
    %68 = vmatpush.msra.mxu0 %v44
    %69 = vmatmul.f32.gmra.mxu0 %v51
    %v70 = vpop.f32.mrf.mxu0
    %v71 = vadd.f32 %v47, %v70
    %72 = vdwg.mxu0
    %73 = vst.msk [vmem:[#allocation7] sm:$0xff] %vm49, %v71
    // Predicated region
    $region22: #{tpu_custom_call.1} parent=1 // pred_check
      _
    $region23: #{tpu_custom_call.1} parent=1 // pred_check_branch
      %75 = sbr.rel (0) target = $region25
    $region24: #{tpu_custom_call.1} parent=1 // pred_region
      %77 = vsyncadd [#allocation4], 0
      %s79 = sshll.u32 [#allocation7], 4
      %s80 = int_to_ptr.vmem [resolvable:$true] %s79
      %s81 = sshll.u32 %s3, 4
      %s82 = int_to_ptr.hbm [resolvable:$true] %s81
      %84 = dma.vmem_to_hbm [thread:$0]  %s80, 128, %s82, [#allocation4]
    $region25: #{tpu_custom_call.1} parent=1 // pred_fallthru
      _
    // Predicated region
    $region26: #{tpu_custom_call.1} parent=1 // pred_check
      _
    $region27: #{tpu_custom_call.1} parent=1 // pred_check_branch
      %86 = sbr.rel (0) target = $region29
    $region28: #{tpu_custom_call.1} parent=1 // pred_region
      %88 = dma.done [#allocation4], 128
    $region29: #{tpu_custom_call.1} parent=1 // pred_fallthru
      _
    %89 = vsyncpa [#allocation3], 1
    %90 = vsyncpa [#allocation6], 1
    %91 = vsyncpa [#allocation4], 1

</llo_original>
